<compile_context>
chip_gen: v7x
topology: tpu7x:2x2x1
jax: 0.10.0
libtpu: 0.0.40
codegen_flags: <defaults>
</compile_context>

<pallas_src>
import jax
import jax.numpy as jnp
from jax.experimental import pallas as pl
from jax.experimental.pallas import tpu as pltpu

HIDDEN = 128  # fixed by the module definition (nn.Linear(input_dim, 128))


# ----------------------------------------------------------------------------
# Kernel body
# ----------------------------------------------------------------------------
def expert_kernel(x_ref, w1_ref, b1_ref, w2_ref, b2_ref, o_ref):
    # fc1: [tb, D_in] @ [D_in, 128]  (f32 accumulation on the MXU) + f32 bias.
    h = jnp.dot(x_ref[...], w1_ref[...], preferred_element_type=jnp.float32)
    h = h + b1_ref[...]
    # leaky_relu (PyTorch default negative_slope = 0.01)
    h = jnp.where(h > 0, h, 0.01 * h)
    # fc2: [tb, 128] @ [128, D_out] + f32 bias.  The cast of the fresh
    # activation to the weight dtype (bf16 path) is unavoidable per-step work;
    # it is a no-op on the f32 path.
    h = h.astype(w2_ref.dtype)
    out = jnp.dot(h, w2_ref[...], preferred_element_type=jnp.float32) + b2_ref[...]
    o_ref[...] = out.astype(o_ref.dtype)


# ----------------------------------------------------------------------------
# Generation detection / tiling heuristics
# ----------------------------------------------------------------------------
def _device_kind():
    try:
        return jax.devices()[0].device_kind.lower()
    except Exception:
        return ""


def _is_v7x():
    return "v7" in _device_kind()


def _vmem_capacity_bytes():
    try:
        cap = int(getattr(pltpu.get_tpu_info(), "vmem_capacity_bytes", 0))
        if cap > 0:
            return cap
    except Exception:
        pass
    # Fallback: per-TensorCore physical VMEM by generation.
    return (64 << 20) if _is_v7x() else (128 << 20)


def _choose_batch_tile(B, d_in, d_out, act_itemsize, vmem_cap, is_v7x):
    """Pick a batch tile.  Small problems run as a single grid step; larger
    ones use a tile sized so the buffered activation traffic fits a
    generation-appropriate slice of VMEM."""
    total_act = B * (d_in + d_out) * act_itemsize
    if total_act <= (4 << 20):
        return B  # single-step fast path: no pipelining overhead at all
    budget = min(vmem_cap // 4, 32 << 20)           # 32 MiB on 128 MiB chips, 16 MiB on v7x
    per_row = 2 * (d_in + d_out) * act_itemsize + (HIDDEN + d_out) * 4
    tb = budget // max(per_row, 1)
    cap = 1024 if is_v7x else 2048
    tb = max(64, min(cap, int(tb)))
    tb = (tb // 8) * 8                              # sublane multiple
    if tb >= B:
        return B
    return int(tb)


# ----------------------------------------------------------------------------
# Wrapper
# ----------------------------------------------------------------------------
def expert_forward(x, w1, b1, w2, b2, *, tb=None, use_bf16=True):
    """x: [B, D_in]; w1: [D_in, 128]; b1: [1, 128]; w2: [128, D_out]; b2: [1, D_out]."""
    B, D_in = x.shape
    D_out = w2.shape[1]
    assert w1.shape == (D_in, HIDDEN) and w2.shape == (HIDDEN, D_out)
    assert b1.shape == (1, HIDDEN) and b2.shape == (1, D_out)

    out_dtype = x.dtype
    if use_bf16:
        # One-time wrapper casts: halve streamed-x and resident-weight bytes and
        # keep the MXU on its native bf16 path.  Biases stay f32 and are added
        # to the f32 accumulator inside the kernel.
        x = x.astype(jnp.bfloat16)
        w1 = w1.astype(jnp.bfloat16)
        w2 = w2.astype(jnp.bfloat16)
    b1 = b1.astype(jnp.float32)
    b2 = b2.astype(jnp.float32)

    is_v7x = _is_v7x()
    vmem_cap = _vmem_capacity_bytes()
    act_itemsize = jnp.dtype(x.dtype).itemsize
    w_itemsize = jnp.dtype(w1.dtype).itemsize

    if tb is None:
        tb = _choose_batch_tile(B, D_in, D_out, act_itemsize, vmem_cap, is_v7x)
    tb = int(min(tb, B))
    grid_steps = pl.cdiv(B, tb)  # ragged last block handles B % tb != 0

    # Buffering: resident weights/biases single-buffered; streamed x/out tiles
    # double-buffered (triple on v7x where per-step DMAs are short vs latency).
    act_buffers = 3 if (is_v7x and grid_steps > 2) else 2
    act_mode = pl.Buffered(act_buffers)
    res_mode = pl.Buffered(1)

    # VMEM accounting consistent with the buffer counts above, plus headroom.
    weight_bytes = (D_in * HIDDEN + HIDDEN * D_out) * w_itemsize + (HIDDEN + D_out) * 4
    act_bytes = act_buffers * tb * (D_in + D_out) * act_itemsize
    inter_bytes = tb * (HIDDEN + D_out) * 4
    vmem_limit = weight_bytes + act_bytes + inter_bytes + (8 << 20)
    vmem_limit = int(min(max(vmem_limit, 32 << 20), (vmem_cap * 3) // 4))

    if is_v7x and grid_steps > 1:
        dim_sem = (pltpu.CORE_PARALLEL,)  # split independent batch tiles across the 2 TCs
    else:
        dim_sem = ("parallel",)

    cost = pl.CostEstimate(
        flops=2 * B * (D_in * HIDDEN + HIDDEN * D_out),
        transcendentals=0,
        bytes_accessed=(B * D_in + B * D_out) * act_itemsize + weight_bytes,
    )

    # TODO(synk): if D_in grows past a few thousand, add a trailing "arbitrary"
    # K grid axis with an f32 VMEM accumulator instead of one full-K block.
    # TODO(synk): if this Expert runs inside an MoE and becomes MXU-bound on
    # v6e/v7x (256-wide MXU), stack experts along fc1's N dimension (or add an
    # expert grid axis) so the 128-wide hidden fills the MXU columns.

    def _spec(shape, index_map, mode, with_modes):
        if with_modes:
            return pl.BlockSpec(shape, index_map, pipeline_mode=mode)
        return pl.BlockSpec(shape, index_map)

    def _call(with_modes):
        grid_spec = pltpu.PrefetchScalarGridSpec(
            num_scalar_prefetch=0,
            grid=(grid_steps,),
            in_specs=[
                _spec((tb, D_in), lambda i: (i, 0), act_mode, with_modes),      # x: streamed
                _spec((D_in, HIDDEN), lambda i: (0, 0), res_mode, with_modes),  # w1: resident
                _spec((1, HIDDEN), lambda i: (0, 0), res_mode, with_modes),     # b1: resident
                _spec((HIDDEN, D_out), lambda i: (0, 0), res_mode, with_modes), # w2: resident
                _spec((1, D_out), lambda i: (0, 0), res_mode, with_modes),      # b2: resident
            ],
            out_specs=_spec((tb, D_out), lambda i: (i, 0), act_mode, with_modes),
        )
        return pl.pallas_call(
            expert_kernel,
            out_shape=jax.ShapeDtypeStruct((B, D_out), out_dtype),
            grid_spec=grid_spec,
            compiler_params=pltpu.CompilerParams(
                dimension_semantics=dim_sem,
                vmem_limit_bytes=vmem_limit,
            ),
            cost_estimate=cost,
        )(x, w1, b1, w2, b2)

    try:
        return _call(with_modes=True)
    except Exception:
        # Defensive fallback if this JAX build rejects pipeline_mode /
        # Buffered(1): default double-buffering everywhere (same math).
        return _call(with_modes=False)


# ----------------------------------------------------------------------------
# Parameter init (matches nn.Linear shapes; weights stored transposed [in, out])
# ----------------------------------------------------------------------------
def init_expert_params(key, input_dim, output_dim, dtype=jnp.float32):
    k1, k2, k3, k4 = jax.random.split(key, 4)
    s1 = 1.0 / jnp.sqrt(input_dim)
    s2 = 1.0 / jnp.sqrt(HIDDEN)
    w1 = jax.random.uniform(k1, (input_dim, HIDDEN), dtype, -s1, s1)
    b1 = jax.random.uniform(k2, (1, HIDDEN), dtype, -s1, s1)
    w2 = jax.random.uniform(k3, (HIDDEN, output_dim), dtype, -s2, s2)
    b2 = jax.random.uniform(k4, (1, output_dim), dtype, -s2, s2)
    return w1, b1, w2, b2


if __name__ == "__main__":
    key = jax.random.PRNGKey(0)
    k_x, k_p = jax.random.split(key)

    # Small but non-trivial shapes: B not divisible by the explicit tile,
    # narrow D_in / D_out (exercises masked stores, no padding passes).
    B, input_dim, output_dim = 200, 32, 16
    x = jax.random.normal(k_x, (B, input_dim), jnp.float32)
    w1, b1, w2, b2 = init_expert_params(k_p, input_dim, output_dim)

    # Pure-JAX f32 reference.
    h_ref = x @ w1 + b1
    h_ref = jnp.where(h_ref > 0, h_ref, 0.01 * h_ref)
    ref = h_ref @ w2 + b2

    # 1) Default path: bf16 MXU operands (f32 accumulation), auto tile
    #    (small problem -> single-step grid).  Loosened tolerance for bf16.
    out_bf16 = expert_forward(x, w1, b1, w2, b2)
    jax.block_until_ready(out_bf16)
    assert out_bf16.shape == (B, output_dim)
    assert out_bf16.dtype == x.dtype
    assert jnp.allclose(out_bf16, ref, atol=5e-2, rtol=5e-2), \
        float(jnp.max(jnp.abs(out_bf16 - ref)))

    # 2) Exact-f32 path over a multi-step grid with a ragged last block
    #    (B=200, tb=64 -> 4 steps; D_out=16 masked stores).  Tight tolerance.
    out_f32 = expert_forward(x, w1, b1, w2, b2, tb=64, use_bf16=False)
    jax.block_until_ready(out_f32)
    assert out_f32.shape == (B, output_dim)
    assert jnp.allclose(out_f32, ref, atol=1e-4, rtol=1e-4), \
        float(jnp.max(jnp.abs(out_f32 - ref)))

    print("KERNEL_OK")
</pallas_src>

<mosaic_0001>
module attributes {stable_mosaic.version = 11 : i64} {
  func.func @expert_kernel(%arg0: i32, %arg1: memref<200x32xbf16, #tpu.memory_space<vmem>>, %arg2: memref<32x128xbf16, #tpu.memory_space<vmem>>, %arg3: memref<1x128xf32, #tpu.memory_space<vmem>>, %arg4: memref<128x16xbf16, #tpu.memory_space<vmem>>, %arg5: memref<1x16xf32, #tpu.memory_space<vmem>>, %arg6: memref<200x16xf32, #tpu.memory_space<vmem>>) attributes {dimension_semantics = [#tpu.dimension_semantics<parallel>], iteration_bounds = array<i64: 1>, scalar_prefetch = 0 : i64, scratch_operands = 0 : i64, tpu.core_type = #tpu.core_type<tc>, window_params = [{pipeline_mode = #tpu.pipeline_mode<double_buffered>, transform_indices = @transform_0, window_bounds = array<i64: 200, 32>}, {pipeline_mode = #tpu.pipeline_mode<synchronous>, transform_indices = @transform_1, window_bounds = array<i64: 32, 128>}, {pipeline_mode = #tpu.pipeline_mode<synchronous>, transform_indices = @transform_2, window_bounds = array<i64: 1, 128>}, {pipeline_mode = #tpu.pipeline_mode<synchronous>, transform_indices = @transform_3, window_bounds = array<i64: 128, 16>}, {pipeline_mode = #tpu.pipeline_mode<synchronous>, transform_indices = @transform_4, window_bounds = array<i64: 1, 16>}, {pipeline_mode = #tpu.pipeline_mode<double_buffered>, transform_indices = @transform_5, window_bounds = array<i64: 200, 16>}]} {
    %c0 = arith.constant 0 : index
    %c0_0 = arith.constant 0 : index
    %0 = vector.load %arg1[%c0, %c0_0] : memref<200x32xbf16, #tpu.memory_space<vmem>>, vector<200x32xbf16>
    %c0_1 = arith.constant 0 : index
    %c0_2 = arith.constant 0 : index
    %1 = vector.load %arg2[%c0_1, %c0_2] : memref<32x128xbf16, #tpu.memory_space<vmem>>, vector<32x128xbf16>
    %cst = arith.constant dense<0.000000e+00> : vector<200x128xf32>
    %2 = tpu.matmul %0, %1, %cst {dimension_numbers = #tpu.dot_dimension_numbers<[1], [0], [0], [1], [0, 0, 1, 1], [], []>} : vector<200x32xbf16>, vector<32x128xbf16>, vector<200x128xf32> -> vector<200x128xf32>
    %c0_3 = arith.constant 0 : index
    %c0_4 = arith.constant 0 : index
    %3 = vector.load %arg3[%c0_3, %c0_4] : memref<1x128xf32, #tpu.memory_space<vmem>>, vector<1x128xf32>
    %4 = vector.broadcast %3 : vector<1x128xf32> to vector<200x128xf32>
    %5 = arith.addf %2, %4 : vector<200x128xf32>
    %cst_5 = arith.constant 0.000000e+00 : f32
    %6 = vector.broadcast %cst_5 : f32 to vector<200x128xf32>
    %7 = arith.cmpf ogt, %5, %6 : vector<200x128xf32>
    %cst_6 = arith.constant 0.00999999977 : f32
    %8 = vector.broadcast %cst_6 : f32 to vector<200x128xf32>
    %9 = arith.mulf %8, %5 : vector<200x128xf32>
    %10 = arith.select %7, %5, %9 : vector<200x128xi1>, vector<200x128xf32>
    %11 = arith.truncf %10 : vector<200x128xf32> to vector<200x128xbf16>
    %c0_7 = arith.constant 0 : index
    %c0_8 = arith.constant 0 : index
    %12 = vector.load %arg4[%c0_7, %c0_8] : memref<128x16xbf16, #tpu.memory_space<vmem>>, vector<128x16xbf16>
    %cst_9 = arith.constant dense<0.000000e+00> : vector<200x16xf32>
    %13 = tpu.matmul %11, %12, %cst_9 {dimension_numbers = #tpu.dot_dimension_numbers<[1], [0], [0], [1], [0, 0, 1, 1], [], []>} : vector<200x128xbf16>, vector<128x16xbf16>, vector<200x16xf32> -> vector<200x16xf32>
    %c0_10 = arith.constant 0 : index
    %c0_11 = arith.constant 0 : index
    %14 = vector.load %arg5[%c0_10, %c0_11] : memref<1x16xf32, #tpu.memory_space<vmem>>, vector<1x16xf32>
    %15 = vector.broadcast %14 : vector<1x16xf32> to vector<200x16xf32>
    %16 = arith.addf %13, %15 : vector<200x16xf32>
    %c0_12 = arith.constant 0 : index
    %c0_13 = arith.constant 0 : index
    %17 = vector.load %arg6[%c0_12, %c0_13] : memref<200x16xf32, #tpu.memory_space<vmem>>, vector<200x16xf32>
    tpu.vector_store %arg6[%c0_12, %c0_13], %16 {strides = array<i32>} : memref<200x16xf32, #tpu.memory_space<vmem>>, vector<200x16xf32>,
    return
  }
  func.func @transform_0(%arg0: i32) -> (i32, i32) {
    %c0_i32 = arith.constant 0 : i32
    %c0_i32_0 = arith.constant 0 : i32
    return %arg0, %c0_i32 : i32, i32
  }
  func.func @transform_1(%arg0: i32) -> (i32, i32) {
    %c0_i32 = arith.constant 0 : i32
    %c0_i32_0 = arith.constant 0 : i32
    %c0_i32_1 = arith.constant 0 : i32
    return %c0_i32, %c0_i32_0 : i32, i32
  }
  func.func @transform_2(%arg0: i32) -> (i32, i32) {
    %c0_i32 = arith.constant 0 : i32
    %c0_i32_0 = arith.constant 0 : i32
    %c0_i32_1 = arith.constant 0 : i32
    return %c0_i32, %c0_i32_0 : i32, i32
  }
  func.func @transform_3(%arg0: i32) -> (i32, i32) {
    %c0_i32 = arith.constant 0 : i32
    %c0_i32_0 = arith.constant 0 : i32
    %c0_i32_1 = arith.constant 0 : i32
    return %c0_i32, %c0_i32_0 : i32, i32
  }
  func.func @transform_4(%arg0: i32) -> (i32, i32) {
    %c0_i32 = arith.constant 0 : i32
    %c0_i32_0 = arith.constant 0 : i32
    %c0_i32_1 = arith.constant 0 : i32
    return %c0_i32, %c0_i32_0 : i32, i32
  }
  func.func @transform_5(%arg0: i32) -> (i32, i32) {
    %c0_i32 = arith.constant 0 : i32
    %c0_i32_0 = arith.constant 0 : i32
    return %arg0, %c0_i32 : i32, i32
  }
}

module attributes {stable_mosaic.version = 11 : i64} {
  func.func @expert_kernel(%arg0: i32, %arg1: memref<200x32xbf16, #tpu.memory_space<vmem>>, %arg2: memref<32x128xbf16, #tpu.memory_space<vmem>>, %arg3: memref<1x128xf32, #tpu.memory_space<vmem>>, %arg4: memref<128x16xbf16, #tpu.memory_space<vmem>>, %arg5: memref<1x16xf32, #tpu.memory_space<vmem>>, %arg6: memref<200x16xf32, #tpu.memory_space<vmem>>) attributes {dimension_semantics = [#tpu.dimension_semantics<parallel>], iteration_bounds = array<i64: 1>, scalar_prefetch = 0 : i64, scratch_operands = 0 : i64, tpu.core_type = #tpu.core_type<tc>, window_params = [{transform_indices = @transform_0, window_bounds = array<i64: 200, 32>}, {pipeline_mode = #tpu.pipeline_mode<synchronous>, transform_indices = @transform_1, window_bounds = array<i64: 32, 128>}, {pipeline_mode = #tpu.pipeline_mode<synchronous>, transform_indices = @transform_2, window_bounds = array<i64: 1, 128>}, {pipeline_mode = #tpu.pipeline_mode<synchronous>, transform_indices = @transform_3, window_bounds = array<i64: 128, 16>}, {pipeline_mode = #tpu.pipeline_mode<synchronous>, transform_indices = @transform_4, window_bounds = array<i64: 1, 16>}, {transform_indices = @transform_5, window_bounds = array<i64: 200, 16>}]} {
    %c0 = arith.constant 0 : index
    %c0_0 = arith.constant 0 : index
    %0 = vector.load %arg1[%c0, %c0_0] : memref<200x32xbf16, #tpu.memory_space<vmem>>, vector<200x32xbf16>
    %c0_1 = arith.constant 0 : index
    %c0_2 = arith.constant 0 : index
    %1 = vector.load %arg2[%c0_1, %c0_2] : memref<32x128xbf16, #tpu.memory_space<vmem>>, vector<32x128xbf16>
    %cst = arith.constant dense<0.000000e+00> : vector<200x128xf32>
    %2 = tpu.matmul %0, %1, %cst {dimension_numbers = #tpu.dot_dimension_numbers<[1], [0], [0], [1], [0, 0, 1, 1], [], []>} : vector<200x32xbf16>, vector<32x128xbf16>, vector<200x128xf32> -> vector<200x128xf32>
    %c0_3 = arith.constant 0 : index
    %c0_4 = arith.constant 0 : index
    %3 = vector.load %arg3[%c0_3, %c0_4] : memref<1x128xf32, #tpu.memory_space<vmem>>, vector<1x128xf32>
    %4 = vector.broadcast %3 : vector<1x128xf32> to vector<200x128xf32>
    %5 = arith.addf %2, %4 : vector<200x128xf32>
    %cst_5 = arith.constant 0.000000e+00 : f32
    %6 = vector.broadcast %cst_5 : f32 to vector<200x128xf32>
    %7 = arith.cmpf ogt, %5, %6 : vector<200x128xf32>
    %cst_6 = arith.constant 0.00999999977 : f32
    %8 = vector.broadcast %cst_6 : f32 to vector<200x128xf32>
    %9 = arith.mulf %8, %5 : vector<200x128xf32>
    %10 = arith.select %7, %5, %9 : vector<200x128xi1>, vector<200x128xf32>
    %11 = arith.truncf %10 : vector<200x128xf32> to vector<200x128xbf16>
    %c0_7 = arith.constant 0 : index
    %c0_8 = arith.constant 0 : index
    %12 = vector.load %arg4[%c0_7, %c0_8] : memref<128x16xbf16, #tpu.memory_space<vmem>>, vector<128x16xbf16>
    %cst_9 = arith.constant dense<0.000000e+00> : vector<200x16xf32>
    %13 = tpu.matmul %11, %12, %cst_9 {dimension_numbers = #tpu.dot_dimension_numbers<[1], [0], [0], [1], [0, 0, 1, 1], [], []>} : vector<200x128xbf16>, vector<128x16xbf16>, vector<200x16xf32> -> vector<200x16xf32>
    %c0_10 = arith.constant 0 : index
    %c0_11 = arith.constant 0 : index
    %14 = vector.load %arg5[%c0_10, %c0_11] : memref<1x16xf32, #tpu.memory_space<vmem>>, vector<1x16xf32>
    %15 = vector.broadcast %14 : vector<1x16xf32> to vector<200x16xf32>
    %16 = arith.addf %13, %15 : vector<200x16xf32>
    %c0_12 = arith.constant 0 : index
    %c0_13 = arith.constant 0 : index
    %17 = vector.load %arg6[%c0_12, %c0_13] : memref<200x16xf32, #tpu.memory_space<vmem>>, vector<200x16xf32>
    tpu.vector_store %arg6[%c0_12, %c0_13], %16 {strides = array<i32>} : memref<200x16xf32, #tpu.memory_space<vmem>>, vector<200x16xf32>,
    return
  }
  func.func @transform_0(%arg0: i32) -> (i32, i32) {
    %c0_i32 = arith.constant 0 : i32
    %c0_i32_0 = arith.constant 0 : i32
    return %arg0, %c0_i32 : i32, i32
  }
  func.func @transform_1(%arg0: i32) -> (i32, i32) {
    %c0_i32 = arith.constant 0 : i32
    %c0_i32_0 = arith.constant 0 : i32
    %c0_i32_1 = arith.constant 0 : i32
    return %c0_i32, %c0_i32_0 : i32, i32
  }
  func.func @transform_2(%arg0: i32) -> (i32, i32) {
    %c0_i32 = arith.constant 0 : i32
    %c0_i32_0 = arith.constant 0 : i32
    %c0_i32_1 = arith.constant 0 : i32
    return %c0_i32, %c0_i32_0 : i32, i32
  }
  func.func @transform_3(%arg0: i32) -> (i32, i32) {
    %c0_i32 = arith.constant 0 : i32
    %c0_i32_0 = arith.constant 0 : i32
    %c0_i32_1 = arith.constant 0 : i32
    return %c0_i32, %c0_i32_0 : i32, i32
  }
  func.func @transform_4(%arg0: i32) -> (i32, i32) {
    %c0_i32 = arith.constant 0 : i32
    %c0_i32_0 = arith.constant 0 : i32
    %c0_i32_1 = arith.constant 0 : i32
    return %c0_i32, %c0_i32_0 : i32, i32
  }
  func.func @transform_5(%arg0: i32) -> (i32, i32) {
    %c0_i32 = arith.constant 0 : i32
    %c0_i32_0 = arith.constant 0 : i32
    return %arg0, %c0_i32 : i32, i32
  }
}

</mosaic_0001>

<llo_original>
// kernel: tpu_custom_call.1
$region0: #{tpu_custom_call.1}
  #allocation0 [shape = 'u32[]', space=smem, size = 0x4, offset = 0x4, fixed_abs, tag = 'smem constant byte address 0x4 - core index']
  #allocation1 [shape = 'u32[144,128]{1,0:T(1,128)}', space=vmem, size = 0x12000, scoped, tag = 'internal scratch']
  %s0 = inlined_call_operand.vmem [shape: bf16[200,32], index: 0, kind: input, shape index: {}]
  %s1 = inlined_call_operand.vmem [shape: bf16[32,128], index: 1, kind: input, shape index: {}]
  %s2 = inlined_call_operand.vmem [shape: f32[1,128], index: 2, kind: input, shape index: {}]
  %s3 = inlined_call_operand.vmem [shape: bf16[128,16], index: 3, kind: input, shape index: {}]
  %s4 = inlined_call_operand.vmem [shape: f32[1,16], index: 4, kind: input, shape index: {}]
  %s5 = inlined_call_operand.vmem [shape: f32[200,16], index: 5, kind: output, shape index: {}]
  %s6 = sld [smem:[#allocation0]]
  $region30: #{tpu_custom_call.1} parent=0
    _
  %s8 = ssub.s32 1, %s6
  %s9 = scalar_select 0, %s8, %s6
  // Predicated region
  $region2: #{tpu_custom_call.1} parent=0 // pred_check
    _
  $region3: #{tpu_custom_call.1} parent=0 // pred_check_branch
    %11 = sbr.rel (0) target = $region5
  $region4: #{tpu_custom_call.1} parent=0 // pred_region
    _
  $region5: #{tpu_custom_call.1} parent=0 // pred_fallthru
    _
  // Predicated region
  $region6: #{tpu_custom_call.1} parent=0 // pred_check
    _
  $region7: #{tpu_custom_call.1} parent=0 // pred_check_branch
    %13 = sbr.rel (0) target = $region9
  $region8: #{tpu_custom_call.1} parent=0 // pred_region
    _
  $region9: #{tpu_custom_call.1} parent=0 // pred_fallthru
    _
  // Predicated region
  $region10: #{tpu_custom_call.1} parent=0 // pred_check
    _
  $region11: #{tpu_custom_call.1} parent=0 // pred_check_branch
    %15 = sbr.rel (0) target = $region13
  $region12: #{tpu_custom_call.1} parent=0 // pred_region
    _
  $region13: #{tpu_custom_call.1} parent=0 // pred_fallthru
    _
  // Predicated region
  $region14: #{tpu_custom_call.1} parent=0 // pred_check
    _
  $region15: #{tpu_custom_call.1} parent=0 // pred_check_branch
    %17 = sbr.rel (0) target = $region17
  $region16: #{tpu_custom_call.1} parent=0 // pred_region
    _
  $region17: #{tpu_custom_call.1} parent=0 // pred_fallthru
    _
  // Predicated region
  $region18: #{tpu_custom_call.1} parent=0 // pred_check
    _
  $region19: #{tpu_custom_call.1} parent=0 // pred_check_branch
    %19 = sbr.rel (0) target = $region21
  $region20: #{tpu_custom_call.1} parent=0 // pred_region
    _
  $region21: #{tpu_custom_call.1} parent=0 // pred_fallthru
    _
  %v21 = vld [vmem:[%s0] sm:$0xf]
  %v22 = vld [vmem:[%s0 + $0x4] sm:$0xf]
  %v23 = vld [vmem:[%s0 + $0x8] sm:$0xf]
  %v24 = vld [vmem:[%s0 + $0xc] sm:$0xf]
  %v25 = vld [vmem:[%s0 + $0x10] sm:$0xf]
  %v26 = vld [vmem:[%s0 + $0x14] sm:$0xf]
  %v27 = vld [vmem:[%s0 + $0x18] sm:$0xf]
  %v28 = vld [vmem:[%s0 + $0x1c] sm:$0xf]
  %v29 = vld [vmem:[%s0 + $0x20] sm:$0xf]
  %v30 = vld [vmem:[%s0 + $0x24] sm:$0xf]
  %v31 = vld [vmem:[%s0 + $0x28] sm:$0xf]
  %v32 = vld [vmem:[%s0 + $0x2c] sm:$0xf]
  %v33 = vld [vmem:[%s0 + $0x30] sm:$0xf]
  %v34 = vld [vmem:[%s0 + $0x34] sm:$0xf]
  %v35 = vld [vmem:[%s0 + $0x38] sm:$0xf]
  %v36 = vld [vmem:[%s0 + $0x3c] sm:$0xf]
  %v37 = vld [vmem:[%s0 + $0x40] sm:$0xf]
  %v38 = vld [vmem:[%s0 + $0x44] sm:$0xf]
  %v39 = vld [vmem:[%s0 + $0x48] sm:$0xf]
  %v40 = vld [vmem:[%s0 + $0x4c] sm:$0xf]
  %v41 = vld [vmem:[%s0 + $0x50] sm:$0xf]
  %v42 = vld [vmem:[%s0 + $0x54] sm:$0xf]
  %v43 = vld [vmem:[%s0 + $0x58] sm:$0xf]
  %v44 = vld [vmem:[%s0 + $0x5c] sm:$0xf]
  %v45 = vld [vmem:[%s0 + $0x60] sm:$0xf]
  %v46 = vld [vmem:[%s1] sm:$0xf]
  %v47 = vld [vmem:[%s1 + $0x4] sm:$0xf]
  %v48 = vld [vmem:[%s1 + $0x8] sm:$0xf]
  %v49 = vld [vmem:[%s1 + $0xc] sm:$0xf]
  %v50 = vld [vmem:[%s2] sm:$0x1]
  %v52 = vlaneseq
  %v53 = vshrl.u32 %v52, 7
  %v54 = vsub.s32 0, %v53
  %v55 = vrot.slane %v50, %v54
  %v82 = vunpack.c.l.b16 %v21
  %v83 = vunpack.c.l.b16 %v22
  %v84 = vunpack.c.l.b16 %v23
  %v85 = vunpack.c.l.b16 %v24
  %v86 = vunpack.c.l.b16 %v25
  %v87 = vunpack.c.l.b16 %v26
  %v88 = vunpack.c.l.b16 %v27
  %v89 = vunpack.c.l.b16 %v28
  %v90 = vunpack.c.l.b16 %v29
  %v91 = vunpack.c.l.b16 %v30
  %v92 = vunpack.c.l.b16 %v31
  %v93 = vunpack.c.l.b16 %v32
  %v94 = vunpack.c.l.b16 %v33
  %v95 = vunpack.c.l.b16 %v34
  %v96 = vunpack.c.l.b16 %v35
  %v97 = vunpack.c.l.b16 %v36
  %v98 = vunpack.c.l.b16 %v37
  %v99 = vunpack.c.l.b16 %v38
  %v100 = vunpack.c.l.b16 %v39
  %v101 = vunpack.c.l.b16 %v40
  %v102 = vunpack.c.l.b16 %v41
  %v103 = vunpack.c.l.b16 %v42
  %v104 = vunpack.c.l.b16 %v43
  %v105 = vunpack.c.l.b16 %v44
  %v106 = vunpack.c.l.b16 %v45
  %v107 = vpack.c.b16 %v83, %v82
  %v108 = vpack.c.b16 %v85, %v84
  %v109 = vpack.c.b16 %v87, %v86
  %v110 = vpack.c.b16 %v89, %v88
  %v111 = vpack.c.b16 %v91, %v90
  %v112 = vpack.c.b16 %v93, %v92
  %v113 = vpack.c.b16 %v95, %v94
  %v114 = vpack.c.b16 %v97, %v96
  %v115 = vpack.c.b16 %v99, %v98
  %v116 = vpack.c.b16 %v101, %v100
  %v117 = vpack.c.b16 %v103, %v102
  %v118 = vpack.c.b16 %v105, %v104
  %v119 = vpack.c.b16 %v106, %v106
  %v124 = vunpack.c.l.b16 %v46
  %v125 = vunpack.c.l.b16 %v47
  %v126 = vunpack.c.l.b16 %v48
  %v127 = vunpack.c.l.b16 %v49
  %v128 = vpack.c.b16 %v125, %v124
  %v129 = vpack.c.b16 %v127, %v126
  %vm132 = vcmask 261120
  %v134 = vsel %vm132, %v107, 0
  %v137 = vsel %vm132, %v108, 0
  %v140 = vsel %vm132, %v109, 0
  %v143 = vsel %vm132, %v110, 0
  %v146 = vsel %vm132, %v111, 0
  %v149 = vsel %vm132, %v112, 0
  %v152 = vsel %vm132, %v113, 0
  %v155 = vsel %vm132, %v114, 0
  %v158 = vsel %vm132, %v115, 0
  %v161 = vsel %vm132, %v116, 0
  %v164 = vsel %vm132, %v117, 0
  %v167 = vsel %vm132, %v118, 0
  %v170 = vsel %vm132, %v119, 0
  %172 = vmatprep.subr.bf16.mxu0 0
  %173 = vmatpush1.bf16.msra.mxu0 %v128
  %174 = vmatprep.subr.bf16.mxu0 0
  %175 = vmatpush1.bf16.msra.mxu0 %v129
  %176 = vmatprep.subr.bf16.mxu0 0
  %177 = vmatpush1.bf16.msra.mxu0 0
  %178 = vmatprep.subr.bf16.mxu0 0
  %179 = vmatpush1.bf16.msra.mxu0 0
  %180 = vmatprep.subr.bf16.mxu0 0
  %181 = vmatpush1.bf16.msra.mxu0 0
  %182 = vmatprep.subr.bf16.mxu0 0
  %183 = vmatpush1.bf16.msra.mxu0 0
  %184 = vmatprep.subr.bf16.mxu0 0
  %185 = vmatpush1.bf16.msra.mxu0 0
  %186 = vmatprep.subr.bf16.mxu0 0
  %187 = vmatpush1.bf16.msra.mxu0 0
  %188 = vmatprep.subr.bf16.mxu0 0
  %189 = vmatpush1.bf16.msra.mxu0 0
  %190 = vmatprep.subr.bf16.mxu0 0
  %191 = vmatpush1.bf16.msra.mxu0 0
  %192 = vmatprep.subr.bf16.mxu0 0
  %193 = vmatpush1.bf16.msra.mxu0 0
  %194 = vmatprep.subr.bf16.mxu0 0
  %195 = vmatpush1.bf16.msra.mxu0 0
  %196 = vmatprep.subr.bf16.mxu0 0
  %197 = vmatpush1.bf16.msra.mxu0 0
  %198 = vmatprep.subr.bf16.mxu0 0
  %199 = vmatpush1.bf16.msra.mxu0 0
  %200 = vmatprep.subr.bf16.mxu0 0
  %201 = vmatpush1.bf16.msra.mxu0 0
  %202 = vmatprep.subr.bf16.mxu0 0
  %203 = vmatpush1.bf16.msra.mxu0 0
  %204 = vmatprep.mubr.bf16.mxu0 0
  %205 = vmatmul.mubr.bf16.gmra.mrb[0].mxu0 %v134
  %v206 = vpop.f32.mrb[0].mxu0
  %v207 = vadd.f32 %v55, %v206
  %v208 = vpop.f32.mrb[0].mxu0
  %v209 = vpop.f32.mrb[0].mxu0
  %v210 = vadd.f32 %v55, %v209
  %v211 = vpop.f32.mrb[0].mxu0
  %212 = vmatprep.mubr.bf16.mxu0 0
  %213 = vmatmul.mubr.bf16.gmra.mrb[0].mxu0 %v137
  %v214 = vpop.f32.mrb[0].mxu0
  %v215 = vadd.f32 %v55, %v214
  %v216 = vpop.f32.mrb[0].mxu0
  %v217 = vpop.f32.mrb[0].mxu0
  %v218 = vadd.f32 %v55, %v217
  %v219 = vpop.f32.mrb[0].mxu0
  %220 = vmatprep.mubr.bf16.mxu0 0
  %221 = vmatmul.mubr.bf16.gmra.mrb[0].mxu0 %v140
  %v222 = vpop.f32.mrb[0].mxu0
  %v223 = vadd.f32 %v55, %v222
  %v224 = vpop.f32.mrb[0].mxu0
  %v225 = vpop.f32.mrb[0].mxu0
  %v226 = vadd.f32 %v55, %v225
  %v227 = vpop.f32.mrb[0].mxu0
  %228 = vmatprep.mubr.bf16.mxu0 0
  %229 = vmatmul.mubr.bf16.gmra.mrb[0].mxu0 %v143
  %v230 = vpop.f32.mrb[0].mxu0
  %v231 = vadd.f32 %v55, %v230
  %v232 = vpop.f32.mrb[0].mxu0
  %v233 = vpop.f32.mrb[0].mxu0
  %v234 = vadd.f32 %v55, %v233
  %v235 = vpop.f32.mrb[0].mxu0
  %236 = vmatprep.mubr.bf16.mxu0 0
  %237 = vmatmul.mubr.bf16.gmra.mrb[0].mxu0 %v146
  %v238 = vpop.f32.mrb[0].mxu0
  %v239 = vadd.f32 %v55, %v238
  %v240 = vpop.f32.mrb[0].mxu0
  %v241 = vpop.f32.mrb[0].mxu0
  %v242 = vadd.f32 %v55, %v241
  %v243 = vpop.f32.mrb[0].mxu0
  %244 = vmatprep.mubr.bf16.mxu0 0
  %245 = vmatmul.mubr.bf16.gmra.mrb[0].mxu0 %v149
  %v246 = vpop.f32.mrb[0].mxu0
  %v247 = vadd.f32 %v55, %v246
  %v248 = vpop.f32.mrb[0].mxu0
  %v249 = vpop.f32.mrb[0].mxu0
  %v250 = vadd.f32 %v55, %v249
  %v251 = vpop.f32.mrb[0].mxu0
  %252 = vmatprep.mubr.bf16.mxu0 0
  %253 = vmatmul.mubr.bf16.gmra.mrb[0].mxu0 %v152
  %v254 = vpop.f32.mrb[0].mxu0
  %v255 = vadd.f32 %v55, %v254
  %v256 = vpop.f32.mrb[0].mxu0
  %v257 = vpop.f32.mrb[0].mxu0
  %v258 = vadd.f32 %v55, %v257
  %v259 = vpop.f32.mrb[0].mxu0
  %260 = vmatprep.mubr.bf16.mxu0 0
  %261 = vmatmul.mubr.bf16.gmra.mrb[0].mxu0 %v155
  %v262 = vpop.f32.mrb[0].mxu0
  %v263 = vadd.f32 %v55, %v262
  %v264 = vpop.f32.mrb[0].mxu0
  %v265 = vpop.f32.mrb[0].mxu0
  %v266 = vadd.f32 %v55, %v265
  %v267 = vpop.f32.mrb[0].mxu0
  %268 = vmatprep.mubr.bf16.mxu0 0
  %269 = vmatmul.mubr.bf16.gmra.mrb[0].mxu0 %v158
  %v270 = vpop.f32.mrb[0].mxu0
  %v271 = vadd.f32 %v55, %v270
  %v272 = vpop.f32.mrb[0].mxu0
  %v273 = vpop.f32.mrb[0].mxu0
  %v274 = vadd.f32 %v55, %v273
  %v275 = vpop.f32.mrb[0].mxu0
  %276 = vmatprep.mubr.bf16.mxu0 0
  %277 = vmatmul.mubr.bf16.gmra.mrb[0].mxu0 %v161
  %v278 = vpop.f32.mrb[0].mxu0
  %v279 = vadd.f32 %v55, %v278
  %v280 = vpop.f32.mrb[0].mxu0
  %v281 = vpop.f32.mrb[0].mxu0
  %v282 = vadd.f32 %v55, %v281
  %v283 = vpop.f32.mrb[0].mxu0
  %284 = vmatprep.mubr.bf16.mxu0 0
  %285 = vmatmul.mubr.bf16.gmra.mrb[0].mxu0 %v164
  %v286 = vpop.f32.mrb[0].mxu0
  %v287 = vadd.f32 %v55, %v286
  %v288 = vpop.f32.mrb[0].mxu0
  %v289 = vpop.f32.mrb[0].mxu0
  %v290 = vadd.f32 %v55, %v289
  %v291 = vpop.f32.mrb[0].mxu0
  %292 = vmatprep.mubr.bf16.mxu0 0
  %293 = vmatmul.mubr.bf16.gmra.mrb[0].mxu0 %v167
  %v294 = vpop.f32.mrb[0].mxu0
  %v295 = vadd.f32 %v55, %v294
  %v296 = vpop.f32.mrb[0].mxu0
  %v297 = vpop.f32.mrb[0].mxu0
  %v298 = vadd.f32 %v55, %v297
  %v299 = vpop.f32.mrb[0].mxu0
  %300 = vmatprep.mubr.bf16.mxu0 0
  %301 = vmatmul.mubr.bf16.gmra.mrb[0].mxu0 %v170
  %v302 = vpop.f32.mrb[0].mxu0
  %v303 = vadd.f32 %v55, %v302
  %v304 = vpop.f32.mrb[0].mxu0
  %v305 = vpop.f32.mrb[0].mxu0
  %v306 = vpop.f32.mrb[0].mxu0
  %307 = vdwg.mxu0
  %vm308 = vcmp.gt.f32.partialorder %v207, 0.0
  %vm309 = vcmp.gt.f32.partialorder %v210, 0.0
  %vm310 = vcmp.gt.f32.partialorder %v215, 0.0
  %vm311 = vcmp.gt.f32.partialorder %v218, 0.0
  %vm312 = vcmp.gt.f32.partialorder %v223, 0.0
  %vm313 = vcmp.gt.f32.partialorder %v226, 0.0
  %vm314 = vcmp.gt.f32.partialorder %v231, 0.0
  %vm315 = vcmp.gt.f32.partialorder %v234, 0.0
  %vm316 = vcmp.gt.f32.partialorder %v239, 0.0
  %vm317 = vcmp.gt.f32.partialorder %v242, 0.0
  %vm318 = vcmp.gt.f32.partialorder %v247, 0.0
  %vm319 = vcmp.gt.f32.partialorder %v250, 0.0
  %vm320 = vcmp.gt.f32.partialorder %v255, 0.0
  %vm321 = vcmp.gt.f32.partialorder %v258, 0.0
  %vm322 = vcmp.gt.f32.partialorder %v263, 0.0
  %vm323 = vcmp.gt.f32.partialorder %v266, 0.0
  %vm324 = vcmp.gt.f32.partialorder %v271, 0.0
  %vm325 = vcmp.gt.f32.partialorder %v274, 0.0
  %vm326 = vcmp.gt.f32.partialorder %v279, 0.0
  %vm327 = vcmp.gt.f32.partialorder %v282, 0.0
  %vm328 = vcmp.gt.f32.partialorder %v287, 0.0
  %vm329 = vcmp.gt.f32.partialorder %v290, 0.0
  %vm330 = vcmp.gt.f32.partialorder %v295, 0.0
  %vm331 = vcmp.gt.f32.partialorder %v298, 0.0
  %vm332 = vcmp.gt.f32.partialorder %v303, 0.0
  %v333 = vmul.f32 %v207, 0.01
  %v334 = vmul.f32 %v210, 0.01
  %v335 = vmul.f32 %v215, 0.01
  %v336 = vmul.f32 %v218, 0.01
  %v337 = vmul.f32 %v223, 0.01
  %v338 = vmul.f32 %v226, 0.01
  %v339 = vmul.f32 %v231, 0.01
  %v340 = vmul.f32 %v234, 0.01
  %v341 = vmul.f32 %v239, 0.01
  %v342 = vmul.f32 %v242, 0.01
  %v343 = vmul.f32 %v247, 0.01
  %v344 = vmul.f32 %v250, 0.01
  %v345 = vmul.f32 %v255, 0.01
  %v346 = vmul.f32 %v258, 0.01
  %v347 = vmul.f32 %v263, 0.01
  %v348 = vmul.f32 %v266, 0.01
  %v349 = vmul.f32 %v271, 0.01
  %v350 = vmul.f32 %v274, 0.01
  %v351 = vmul.f32 %v279, 0.01
  %v352 = vmul.f32 %v282, 0.01
  %v353 = vmul.f32 %v287, 0.01
  %v354 = vmul.f32 %v290, 0.01
  %v355 = vmul.f32 %v295, 0.01
  %v356 = vmul.f32 %v298, 0.01
  %v357 = vmul.f32 %v303, 0.01
  %v358 = vsel %vm308, %v207, %v333
  %v359 = vsel %vm309, %v210, %v334
  %v360 = vsel %vm310, %v215, %v335
  %v361 = vsel %vm311, %v218, %v336
  %v362 = vsel %vm312, %v223, %v337
  %v363 = vsel %vm313, %v226, %v338
  %v364 = vsel %vm314, %v231, %v339
  %v365 = vsel %vm315, %v234, %v340
  %v366 = vsel %vm316, %v239, %v341
  %v367 = vsel %vm317, %v242, %v342
  %v368 = vsel %vm318, %v247, %v343
  %v369 = vsel %vm319, %v250, %v344
  %v370 = vsel %vm320, %v255, %v345
  %v371 = vsel %vm321, %v258, %v346
  %v372 = vsel %vm322, %v263, %v347
  %v373 = vsel %vm323, %v266, %v348
  %v374 = vsel %vm324, %v271, %v349
  %v375 = vsel %vm325, %v274, %v350
  %v376 = vsel %vm326, %v279, %v351
  %v377 = vsel %vm327, %v282, %v352
  %v378 = vsel %vm328, %v287, %v353
  %v379 = vsel %vm329, %v290, %v354
  %v380 = vsel %vm330, %v295, %v355
  %v381 = vsel %vm331, %v298, %v356
  %v382 = vsel %vm332, %v303, %v357
  %v383 = vpack.c.bf16 %v359, %v358
  %v384 = vpack.c.bf16 %v361, %v360
  %v385 = vpack.c.bf16 %v363, %v362
  %v386 = vpack.c.bf16 %v365, %v364
  %v387 = vpack.c.bf16 %v367, %v366
  %v388 = vpack.c.bf16 %v369, %v368
  %v389 = vpack.c.bf16 %v371, %v370
  %v390 = vpack.c.bf16 %v373, %v372
  %v391 = vpack.c.bf16 %v375, %v374
  %v392 = vpack.c.bf16 %v377, %v376
  %v393 = vpack.c.bf16 %v379, %v378
  %v394 = vpack.c.bf16 %v381, %v380
  %v395 = vpack.c.bf16 %v382, %v382
  %v396 = vld [vmem:[%s3] sm:$0xf]
  %v397 = vld [vmem:[%s3 + $0x4] sm:$0xf]
  %v398 = vld [vmem:[%s3 + $0x8] sm:$0xf]
  %v399 = vld [vmem:[%s3 + $0xc] sm:$0xf]
  %v400 = vld [vmem:[%s3 + $0x10] sm:$0xf]
  %v401 = vld [vmem:[%s3 + $0x14] sm:$0xf]
  %v402 = vld [vmem:[%s3 + $0x18] sm:$0xf]
  %v403 = vld [vmem:[%s3 + $0x1c] sm:$0xf]
  %v404 = vld [vmem:[%s3 + $0x20] sm:$0xf]
  %v405 = vld [vmem:[%s3 + $0x24] sm:$0xf]
  %v406 = vld [vmem:[%s3 + $0x28] sm:$0xf]
  %v407 = vld [vmem:[%s3 + $0x2c] sm:$0xf]
  %v408 = vld [vmem:[%s3 + $0x30] sm:$0xf]
  %v409 = vld [vmem:[%s3 + $0x34] sm:$0xf]
  %v410 = vld [vmem:[%s3 + $0x38] sm:$0xf]
  %v411 = vld [vmem:[%s3 + $0x3c] sm:$0xf]
  %v412 = vld [vmem:[%s4] sm:$0x1]
  %v414 = vlaneseq
  %v415 = vshrl.u32 %v414, 7
  %v416 = vsub.s32 0, %v415
  %v417 = vrot.slane %v412, %v416
  %v435 = vunpack.c.l.b16 %v396
  %v436 = vunpack.c.l.b16 %v397
  %v437 = vunpack.c.l.b16 %v398
  %v438 = vunpack.c.l.b16 %v399
  %v439 = vunpack.c.l.b16 %v400
  %v440 = vunpack.c.l.b16 %v401
  %v441 = vunpack.c.l.b16 %v402
  %v442 = vunpack.c.l.b16 %v403
  %v443 = vunpack.c.l.b16 %v404
  %v444 = vunpack.c.l.b16 %v405
  %v445 = vunpack.c.l.b16 %v406
  %v446 = vunpack.c.l.b16 %v407
  %v447 = vunpack.c.l.b16 %v408
  %v448 = vunpack.c.l.b16 %v409
  %v449 = vunpack.c.l.b16 %v410
  %v450 = vunpack.c.l.b16 %v411
  %v451 = vpack.c.b16 %v436, %v435
  %v452 = vpack.c.b16 %v438, %v437
  %v453 = vpack.c.b16 %v440, %v439
  %v454 = vpack.c.b16 %v442, %v441
  %v455 = vpack.c.b16 %v444, %v443
  %v456 = vpack.c.b16 %v446, %v445
  %v457 = vpack.c.b16 %v448, %v447
  %v458 = vpack.c.b16 %v450, %v449
  %467 = vmatprep.subr.bf16.mxu0 0
  %468 = vmatpush1.bf16.msra.mxu0 %v451
  %469 = vmatprep.subr.bf16.mxu0 0
  %470 = vmatpush1.bf16.msra.mxu0 %v452
  %471 = vmatprep.subr.bf16.mxu0 0
  %472 = vmatpush1.bf16.msra.mxu0 %v453
  %473 = vmatprep.subr.bf16.mxu0 0
  %474 = vmatpush1.bf16.msra.mxu0 %v454
  %475 = vmatprep.subr.bf16.mxu0 0
  %476 = vmatpush1.bf16.msra.mxu0 %v455
  %477 = vmatprep.subr.bf16.mxu0 0
  %478 = vmatpush1.bf16.msra.mxu0 %v456
  %479 = vmatprep.subr.bf16.mxu0 0
  %480 = vmatpush1.bf16.msra.mxu0 %v457
  %481 = vmatprep.subr.bf16.mxu0 0
  %482 = vmatpush1.bf16.msra.mxu0 %v458
  %483 = vmatprep.subr.bf16.mxu0 0
  %484 = vmatpush1.bf16.msra.mxu0 0
  %485 = vmatprep.subr.bf16.mxu0 0
  %486 = vmatpush1.bf16.msra.mxu0 0
  %487 = vmatprep.subr.bf16.mxu0 0
  %488 = vmatpush1.bf16.msra.mxu0 0
  %489 = vmatprep.subr.bf16.mxu0 0
  %490 = vmatpush1.bf16.msra.mxu0 0
  %491 = vmatprep.subr.bf16.mxu0 0
  %492 = vmatpush1.bf16.msra.mxu0 0
  %493 = vmatprep.subr.bf16.mxu0 0
  %494 = vmatpush1.bf16.msra.mxu0 0
  %495 = vmatprep.subr.bf16.mxu0 0
  %496 = vmatpush1.bf16.msra.mxu0 0
  %497 = vmatprep.subr.bf16.mxu0 0
  %498 = vmatpush1.bf16.msra.mxu0 0
  %499 = vmatprep.mubr.bf16.mxu0 0
  %500 = vmatmul.mubr.bf16.gmra.mrb[0].mxu0 %v383
  %v501 = vpop.f32.mrb[0].mxu0
  %v502 = vadd.f32 %v417, %v501
  %v503 = vpop.f32.mrb[0].mxu0
  %v504 = vpop.f32.mrb[0].mxu0
  %v505 = vadd.f32 %v417, %v504
  %v506 = vpop.f32.mrb[0].mxu0
  %507 = vmatprep.mubr.bf16.mxu0 0
  %508 = vmatmul.mubr.bf16.gmra.mrb[0].mxu0 %v384
  %v509 = vpop.f32.mrb[0].mxu0
  %v510 = vadd.f32 %v417, %v509
  %v511 = vpop.f32.mrb[0].mxu0
  %v512 = vpop.f32.mrb[0].mxu0
  %v513 = vadd.f32 %v417, %v512
  %v514 = vpop.f32.mrb[0].mxu0
  %515 = vmatprep.mubr.bf16.mxu0 0
  %516 = vmatmul.mubr.bf16.gmra.mrb[0].mxu0 %v385
  %v517 = vpop.f32.mrb[0].mxu0
  %v518 = vadd.f32 %v417, %v517
  %v519 = vpop.f32.mrb[0].mxu0
  %v520 = vpop.f32.mrb[0].mxu0
  %v521 = vadd.f32 %v417, %v520
  %v522 = vpop.f32.mrb[0].mxu0
  %523 = vmatprep.mubr.bf16.mxu0 0
  %524 = vmatmul.mubr.bf16.gmra.mrb[0].mxu0 %v386
  %v525 = vpop.f32.mrb[0].mxu0
  %v526 = vadd.f32 %v417, %v525
  %v527 = vpop.f32.mrb[0].mxu0
  %v528 = vpop.f32.mrb[0].mxu0
  %v529 = vadd.f32 %v417, %v528
  %v530 = vpop.f32.mrb[0].mxu0
  %531 = vmatprep.mubr.bf16.mxu0 0
  %532 = vmatmul.mubr.bf16.gmra.mrb[0].mxu0 %v387
  %v533 = vpop.f32.mrb[0].mxu0
  %v534 = vadd.f32 %v417, %v533
  %v535 = vpop.f32.mrb[0].mxu0
  %v536 = vpop.f32.mrb[0].mxu0
  %v537 = vadd.f32 %v417, %v536
  %v538 = vpop.f32.mrb[0].mxu0
  %539 = vmatprep.mubr.bf16.mxu0 0
  %540 = vmatmul.mubr.bf16.gmra.mrb[0].mxu0 %v388
  %v541 = vpop.f32.mrb[0].mxu0
  %v542 = vadd.f32 %v417, %v541
  %v543 = vpop.f32.mrb[0].mxu0
  %v544 = vpop.f32.mrb[0].mxu0
  %v545 = vadd.f32 %v417, %v544
  %v546 = vpop.f32.mrb[0].mxu0
  %547 = vmatprep.mubr.bf16.mxu0 0
  %548 = vmatmul.mubr.bf16.gmra.mrb[0].mxu0 %v389
  %v549 = vpop.f32.mrb[0].mxu0
  %v550 = vadd.f32 %v417, %v549
  %v551 = vpop.f32.mrb[0].mxu0
  %v552 = vpop.f32.mrb[0].mxu0
  %v553 = vadd.f32 %v417, %v552
  %v554 = vpop.f32.mrb[0].mxu0
  %555 = vmatprep.mubr.bf16.mxu0 0
  %556 = vmatmul.mubr.bf16.gmra.mrb[0].mxu0 %v390
  %v557 = vpop.f32.mrb[0].mxu0
  %v558 = vadd.f32 %v417, %v557
  %v559 = vpop.f32.mrb[0].mxu0
  %v560 = vpop.f32.mrb[0].mxu0
  %v561 = vadd.f32 %v417, %v560
  %v562 = vpop.f32.mrb[0].mxu0
  %563 = vmatprep.mubr.bf16.mxu0 0
  %564 = vmatmul.mubr.bf16.gmra.mrb[0].mxu0 %v391
  %v565 = vpop.f32.mrb[0].mxu0
  %v566 = vadd.f32 %v417, %v565
  %v567 = vpop.f32.mrb[0].mxu0
  %v568 = vpop.f32.mrb[0].mxu0
  %v569 = vadd.f32 %v417, %v568
  %v570 = vpop.f32.mrb[0].mxu0
  %571 = vmatprep.mubr.bf16.mxu0 0
  %572 = vmatmul.mubr.bf16.gmra.mrb[0].mxu0 %v392
  %v573 = vpop.f32.mrb[0].mxu0
  %v574 = vadd.f32 %v417, %v573
  %v575 = vpop.f32.mrb[0].mxu0
  %v576 = vpop.f32.mrb[0].mxu0
  %v577 = vadd.f32 %v417, %v576
  %v578 = vpop.f32.mrb[0].mxu0
  %579 = vmatprep.mubr.bf16.mxu0 0
  %580 = vmatmul.mubr.bf16.gmra.mrb[0].mxu0 %v393
  %v581 = vpop.f32.mrb[0].mxu0
  %v582 = vadd.f32 %v417, %v581
  %v583 = vpop.f32.mrb[0].mxu0
  %v584 = vpop.f32.mrb[0].mxu0
  %v585 = vadd.f32 %v417, %v584
  %v586 = vpop.f32.mrb[0].mxu0
  %587 = vmatprep.mubr.bf16.mxu0 0
  %588 = vmatmul.mubr.bf16.gmra.mrb[0].mxu0 %v394
  %v589 = vpop.f32.mrb[0].mxu0
  %v590 = vadd.f32 %v417, %v589
  %v591 = vpop.f32.mrb[0].mxu0
  %v592 = vpop.f32.mrb[0].mxu0
  %v593 = vadd.f32 %v417, %v592
  %v594 = vpop.f32.mrb[0].mxu0
  %595 = vmatprep.mubr.bf16.mxu0 0
  %596 = vmatmul.mubr.bf16.gmra.mrb[0].mxu0 %v395
  %v597 = vpop.f32.mrb[0].mxu0
  %v598 = vadd.f32 %v417, %v597
  %v599 = vpop.f32.mrb[0].mxu0
  %v600 = vpop.f32.mrb[0].mxu0
  %v601 = vpop.f32.mrb[0].mxu0
  %602 = vdwg.mxu0
  %vm603 = vcmask 130048
  %604 = vst.msk [vmem:[%s5] sm:$0xff] %vm603, %v502
  %605 = vst.msk [vmem:[%s5 + $0x8] sm:$0xff] %vm603, %v505
  %606 = vst.msk [vmem:[%s5 + $0x10] sm:$0xff] %vm603, %v510
  %607 = vst.msk [vmem:[%s5 + $0x18] sm:$0xff] %vm603, %v513
  %608 = vst.msk [vmem:[%s5 + $0x20] sm:$0xff] %vm603, %v518
  %609 = vst.msk [vmem:[%s5 + $0x28] sm:$0xff] %vm603, %v521
  %610 = vst.msk [vmem:[%s5 + $0x30] sm:$0xff] %vm603, %v526
  %611 = vst.msk [vmem:[%s5 + $0x38] sm:$0xff] %vm603, %v529
  %612 = vst.msk [vmem:[%s5 + $0x40] sm:$0xff] %vm603, %v534
  %613 = vst.msk [vmem:[%s5 + $0x48] sm:$0xff] %vm603, %v537
  %614 = vst.msk [vmem:[%s5 + $0x50] sm:$0xff] %vm603, %v542
  %615 = vst.msk [vmem:[%s5 + $0x58] sm:$0xff] %vm603, %v545
  %616 = vst.msk [vmem:[%s5 + $0x60] sm:$0xff] %vm603, %v550
  %617 = vst.msk [vmem:[%s5 + $0x68] sm:$0xff] %vm603, %v553
  %618 = vst.msk [vmem:[%s5 + $0x70] sm:$0xff] %vm603, %v558
  %619 = vst.msk [vmem:[%s5 + $0x78] sm:$0xff] %vm603, %v561
  %620 = vst.msk [vmem:[%s5 + $0x80] sm:$0xff] %vm603, %v566
  %621 = vst.msk [vmem:[%s5 + $0x88] sm:$0xff] %vm603, %v569
  %622 = vst.msk [vmem:[%s5 + $0x90] sm:$0xff] %vm603, %v574
  %623 = vst.msk [vmem:[%s5 + $0x98] sm:$0xff] %vm603, %v577
  %624 = vst.msk [vmem:[%s5 + $0xa0] sm:$0xff] %vm603, %v582
  %625 = vst.msk [vmem:[%s5 + $0xa8] sm:$0xff] %vm603, %v585
  %626 = vst.msk [vmem:[%s5 + $0xb0] sm:$0xff] %vm603, %v590
  %627 = vst.msk [vmem:[%s5 + $0xb8] sm:$0xff] %vm603, %v593
  %628 = vst.msk [vmem:[%s5 + $0xc0] sm:$0xff] %vm603, %v598
  // Predicated region
  $region22: #{tpu_custom_call.1} parent=0 // pred_check
    _
  $region23: #{tpu_custom_call.1} parent=0 // pred_check_branch
    %630 = sbr.rel (0) target = $region25
  $region24: #{tpu_custom_call.1} parent=0 // pred_region
    _
  $region25: #{tpu_custom_call.1} parent=0 // pred_fallthru
    _
  // Predicated region
  $region26: #{tpu_custom_call.1} parent=0 // pred_check
    _
  $region27: #{tpu_custom_call.1} parent=0 // pred_check_branch
    %632 = sbr.rel (0) target = $region29
  $region28: #{tpu_custom_call.1} parent=0 // pred_region
    _
  $region29: #{tpu_custom_call.1} parent=0 // pred_fallthru
    _

// kernel: tpu_custom_call.1
$region0: #{tpu_custom_call.1}
  #allocation0 [shape = 'u32[]', space=smem, size = 0x4, offset = 0x4, fixed_abs, tag = 'smem constant byte address 0x4 - core index']
  #allocation1 [shape = 'u32[144,128]{1,0:T(1,128)}', space=vmem, size = 0x12000, scoped, tag = 'internal scratch']
  %s0 = inlined_call_operand.vmem [shape: bf16[200,32], index: 0, kind: input, shape index: {}]
  %s1 = inlined_call_operand.vmem [shape: bf16[32,128], index: 1, kind: input, shape index: {}]
  %s2 = inlined_call_operand.vmem [shape: f32[1,128], index: 2, kind: input, shape index: {}]
  %s3 = inlined_call_operand.vmem [shape: bf16[128,16], index: 3, kind: input, shape index: {}]
  %s4 = inlined_call_operand.vmem [shape: f32[1,16], index: 4, kind: input, shape index: {}]
  %s5 = inlined_call_operand.vmem [shape: f32[200,16], index: 5, kind: output, shape index: {}]
  %s6 = sld [smem:[#allocation0]]
  $region30: #{tpu_custom_call.1} parent=0
    _
  %s8 = ssub.s32 1, %s6
  %s9 = scalar_select 0, %s8, %s6
  // Predicated region
  $region2: #{tpu_custom_call.1} parent=0 // pred_check
    _
  $region3: #{tpu_custom_call.1} parent=0 // pred_check_branch
    %11 = sbr.rel (0) target = $region5
  $region4: #{tpu_custom_call.1} parent=0 // pred_region
    _
  $region5: #{tpu_custom_call.1} parent=0 // pred_fallthru
    _
  // Predicated region
  $region6: #{tpu_custom_call.1} parent=0 // pred_check
    _
  $region7: #{tpu_custom_call.1} parent=0 // pred_check_branch
    %13 = sbr.rel (0) target = $region9
  $region8: #{tpu_custom_call.1} parent=0 // pred_region
    _
  $region9: #{tpu_custom_call.1} parent=0 // pred_fallthru
    _
  // Predicated region
  $region10: #{tpu_custom_call.1} parent=0 // pred_check
    _
  $region11: #{tpu_custom_call.1} parent=0 // pred_check_branch
    %15 = sbr.rel (0) target = $region13
  $region12: #{tpu_custom_call.1} parent=0 // pred_region
    _
  $region13: #{tpu_custom_call.1} parent=0 // pred_fallthru
    _
  // Predicated region
  $region14: #{tpu_custom_call.1} parent=0 // pred_check
    _
  $region15: #{tpu_custom_call.1} parent=0 // pred_check_branch
    %17 = sbr.rel (0) target = $region17
  $region16: #{tpu_custom_call.1} parent=0 // pred_region
    _
  $region17: #{tpu_custom_call.1} parent=0 // pred_fallthru
    _
  // Predicated region
  $region18: #{tpu_custom_call.1} parent=0 // pred_check
    _
  $region19: #{tpu_custom_call.1} parent=0 // pred_check_branch
    %19 = sbr.rel (0) target = $region21
  $region20: #{tpu_custom_call.1} parent=0 // pred_region
    _
  $region21: #{tpu_custom_call.1} parent=0 // pred_fallthru
    _
  %v21 = vld [vmem:[%s0] sm:$0xf]
  %v22 = vld [vmem:[%s0 + $0x4] sm:$0xf]
  %v23 = vld [vmem:[%s0 + $0x8] sm:$0xf]
  %v24 = vld [vmem:[%s0 + $0xc] sm:$0xf]
  %v25 = vld [vmem:[%s0 + $0x10] sm:$0xf]
  %v26 = vld [vmem:[%s0 + $0x14] sm:$0xf]
  %v27 = vld [vmem:[%s0 + $0x18] sm:$0xf]
  %v28 = vld [vmem:[%s0 + $0x1c] sm:$0xf]
  %v29 = vld [vmem:[%s0 + $0x20] sm:$0xf]
  %v30 = vld [vmem:[%s0 + $0x24] sm:$0xf]
  %v31 = vld [vmem:[%s0 + $0x28] sm:$0xf]
  %v32 = vld [vmem:[%s0 + $0x2c] sm:$0xf]
  %v33 = vld [vmem:[%s0 + $0x30] sm:$0xf]
  %v34 = vld [vmem:[%s0 + $0x34] sm:$0xf]
  %v35 = vld [vmem:[%s0 + $0x38] sm:$0xf]
  %v36 = vld [vmem:[%s0 + $0x3c] sm:$0xf]
  %v37 = vld [vmem:[%s0 + $0x40] sm:$0xf]
  %v38 = vld [vmem:[%s0 + $0x44] sm:$0xf]
  %v39 = vld [vmem:[%s0 + $0x48] sm:$0xf]
  %v40 = vld [vmem:[%s0 + $0x4c] sm:$0xf]
  %v41 = vld [vmem:[%s0 + $0x50] sm:$0xf]
  %v42 = vld [vmem:[%s0 + $0x54] sm:$0xf]
  %v43 = vld [vmem:[%s0 + $0x58] sm:$0xf]
  %v44 = vld [vmem:[%s0 + $0x5c] sm:$0xf]
  %v45 = vld [vmem:[%s0 + $0x60] sm:$0xf]
  %v46 = vld [vmem:[%s1] sm:$0xf]
  %v47 = vld [vmem:[%s1 + $0x4] sm:$0xf]
  %v48 = vld [vmem:[%s1 + $0x8] sm:$0xf]
  %v49 = vld [vmem:[%s1 + $0xc] sm:$0xf]
  %v50 = vld [vmem:[%s2] sm:$0x1]
  %v52 = vlaneseq
  %v53 = vshrl.u32 %v52, 7
  %v54 = vsub.s32 0, %v53
  %v55 = vrot.slane %v50, %v54
  %v82 = vunpack.c.l.b16 %v21
  %v83 = vunpack.c.l.b16 %v22
  %v84 = vunpack.c.l.b16 %v23
  %v85 = vunpack.c.l.b16 %v24
  %v86 = vunpack.c.l.b16 %v25
  %v87 = vunpack.c.l.b16 %v26
  %v88 = vunpack.c.l.b16 %v27
  %v89 = vunpack.c.l.b16 %v28
  %v90 = vunpack.c.l.b16 %v29
  %v91 = vunpack.c.l.b16 %v30
  %v92 = vunpack.c.l.b16 %v31
  %v93 = vunpack.c.l.b16 %v32
  %v94 = vunpack.c.l.b16 %v33
  %v95 = vunpack.c.l.b16 %v34
  %v96 = vunpack.c.l.b16 %v35
  %v97 = vunpack.c.l.b16 %v36
  %v98 = vunpack.c.l.b16 %v37
  %v99 = vunpack.c.l.b16 %v38
  %v100 = vunpack.c.l.b16 %v39
  %v101 = vunpack.c.l.b16 %v40
  %v102 = vunpack.c.l.b16 %v41
  %v103 = vunpack.c.l.b16 %v42
  %v104 = vunpack.c.l.b16 %v43
  %v105 = vunpack.c.l.b16 %v44
  %v106 = vunpack.c.l.b16 %v45
  %v107 = vpack.c.b16 %v83, %v82
  %v108 = vpack.c.b16 %v85, %v84
  %v109 = vpack.c.b16 %v87, %v86
  %v110 = vpack.c.b16 %v89, %v88
  %v111 = vpack.c.b16 %v91, %v90
  %v112 = vpack.c.b16 %v93, %v92
  %v113 = vpack.c.b16 %v95, %v94
  %v114 = vpack.c.b16 %v97, %v96
  %v115 = vpack.c.b16 %v99, %v98
  %v116 = vpack.c.b16 %v101, %v100
  %v117 = vpack.c.b16 %v103, %v102
  %v118 = vpack.c.b16 %v105, %v104
  %v119 = vpack.c.b16 %v106, %v106
  %v124 = vunpack.c.l.b16 %v46
  %v125 = vunpack.c.l.b16 %v47
  %v126 = vunpack.c.l.b16 %v48
  %v127 = vunpack.c.l.b16 %v49
  %v128 = vpack.c.b16 %v125, %v124
  %v129 = vpack.c.b16 %v127, %v126
  %vm132 = vcmask 261120
  %v134 = vsel %vm132, %v107, 0
  %v137 = vsel %vm132, %v108, 0
  %v140 = vsel %vm132, %v109, 0
  %v143 = vsel %vm132, %v110, 0
  %v146 = vsel %vm132, %v111, 0
  %v149 = vsel %vm132, %v112, 0
  %v152 = vsel %vm132, %v113, 0
  %v155 = vsel %vm132, %v114, 0
  %v158 = vsel %vm132, %v115, 0
  %v161 = vsel %vm132, %v116, 0
  %v164 = vsel %vm132, %v117, 0
  %v167 = vsel %vm132, %v118, 0
  %v170 = vsel %vm132, %v119, 0
  %172 = vmatprep.subr.bf16.mxu0 0
  %173 = vmatpush1.bf16.msra.mxu0 %v128
  %174 = vmatprep.subr.bf16.mxu0 0
  %175 = vmatpush1.bf16.msra.mxu0 %v129
  %176 = vmatprep.subr.bf16.mxu0 0
  %177 = vmatpush1.bf16.msra.mxu0 0
  %178 = vmatprep.subr.bf16.mxu0 0
  %179 = vmatpush1.bf16.msra.mxu0 0
  %180 = vmatprep.subr.bf16.mxu0 0
  %181 = vmatpush1.bf16.msra.mxu0 0
  %182 = vmatprep.subr.bf16.mxu0 0
  %183 = vmatpush1.bf16.msra.mxu0 0
  %184 = vmatprep.subr.bf16.mxu0 0
  %185 = vmatpush1.bf16.msra.mxu0 0
  %186 = vmatprep.subr.bf16.mxu0 0
  %187 = vmatpush1.bf16.msra.mxu0 0
  %188 = vmatprep.subr.bf16.mxu0 0
  %189 = vmatpush1.bf16.msra.mxu0 0
  %190 = vmatprep.subr.bf16.mxu0 0
  %191 = vmatpush1.bf16.msra.mxu0 0
  %192 = vmatprep.subr.bf16.mxu0 0
  %193 = vmatpush1.bf16.msra.mxu0 0
  %194 = vmatprep.subr.bf16.mxu0 0
  %195 = vmatpush1.bf16.msra.mxu0 0
  %196 = vmatprep.subr.bf16.mxu0 0
  %197 = vmatpush1.bf16.msra.mxu0 0
  %198 = vmatprep.subr.bf16.mxu0 0
  %199 = vmatpush1.bf16.msra.mxu0 0
  %200 = vmatprep.subr.bf16.mxu0 0
  %201 = vmatpush1.bf16.msra.mxu0 0
  %202 = vmatprep.subr.bf16.mxu0 0
  %203 = vmatpush1.bf16.msra.mxu0 0
  %204 = vmatprep.mubr.bf16.mxu0 0
  %205 = vmatmul.mubr.bf16.gmra.mrb[0].mxu0 %v134
  %v206 = vpop.f32.mrb[0].mxu0
  %v207 = vadd.f32 %v55, %v206
  %v208 = vpop.f32.mrb[0].mxu0
  %v209 = vpop.f32.mrb[0].mxu0
  %v210 = vadd.f32 %v55, %v209
  %v211 = vpop.f32.mrb[0].mxu0
  %212 = vmatprep.mubr.bf16.mxu0 0
  %213 = vmatmul.mubr.bf16.gmra.mrb[0].mxu0 %v137
  %v214 = vpop.f32.mrb[0].mxu0
  %v215 = vadd.f32 %v55, %v214
  %v216 = vpop.f32.mrb[0].mxu0
  %v217 = vpop.f32.mrb[0].mxu0
  %v218 = vadd.f32 %v55, %v217
  %v219 = vpop.f32.mrb[0].mxu0
  %220 = vmatprep.mubr.bf16.mxu0 0
  %221 = vmatmul.mubr.bf16.gmra.mrb[0].mxu0 %v140
  %v222 = vpop.f32.mrb[0].mxu0
  %v223 = vadd.f32 %v55, %v222
  %v224 = vpop.f32.mrb[0].mxu0
  %v225 = vpop.f32.mrb[0].mxu0
  %v226 = vadd.f32 %v55, %v225
  %v227 = vpop.f32.mrb[0].mxu0
  %228 = vmatprep.mubr.bf16.mxu0 0
  %229 = vmatmul.mubr.bf16.gmra.mrb[0].mxu0 %v143
  %v230 = vpop.f32.mrb[0].mxu0
  %v231 = vadd.f32 %v55, %v230
  %v232 = vpop.f32.mrb[0].mxu0
  %v233 = vpop.f32.mrb[0].mxu0
  %v234 = vadd.f32 %v55, %v233
  %v235 = vpop.f32.mrb[0].mxu0
  %236 = vmatprep.mubr.bf16.mxu0 0
  %237 = vmatmul.mubr.bf16.gmra.mrb[0].mxu0 %v146
  %v238 = vpop.f32.mrb[0].mxu0
  %v239 = vadd.f32 %v55, %v238
  %v240 = vpop.f32.mrb[0].mxu0
  %v241 = vpop.f32.mrb[0].mxu0
  %v242 = vadd.f32 %v55, %v241
  %v243 = vpop.f32.mrb[0].mxu0
  %244 = vmatprep.mubr.bf16.mxu0 0
  %245 = vmatmul.mubr.bf16.gmra.mrb[0].mxu0 %v149
  %v246 = vpop.f32.mrb[0].mxu0
  %v247 = vadd.f32 %v55, %v246
  %v248 = vpop.f32.mrb[0].mxu0
  %v249 = vpop.f32.mrb[0].mxu0
  %v250 = vadd.f32 %v55, %v249
  %v251 = vpop.f32.mrb[0].mxu0
  %252 = vmatprep.mubr.bf16.mxu0 0
  %253 = vmatmul.mubr.bf16.gmra.mrb[0].mxu0 %v152
  %v254 = vpop.f32.mrb[0].mxu0
  %v255 = vadd.f32 %v55, %v254
  %v256 = vpop.f32.mrb[0].mxu0
  %v257 = vpop.f32.mrb[0].mxu0
  %v258 = vadd.f32 %v55, %v257
  %v259 = vpop.f32.mrb[0].mxu0
  %260 = vmatprep.mubr.bf16.mxu0 0
  %261 = vmatmul.mubr.bf16.gmra.mrb[0].mxu0 %v155
  %v262 = vpop.f32.mrb[0].mxu0
  %v263 = vadd.f32 %v55, %v262
  %v264 = vpop.f32.mrb[0].mxu0
  %v265 = vpop.f32.mrb[0].mxu0
  %v266 = vadd.f32 %v55, %v265
  %v267 = vpop.f32.mrb[0].mxu0
  %268 = vmatprep.mubr.bf16.mxu0 0
  %269 = vmatmul.mubr.bf16.gmra.mrb[0].mxu0 %v158
  %v270 = vpop.f32.mrb[0].mxu0
  %v271 = vadd.f32 %v55, %v270
  %v272 = vpop.f32.mrb[0].mxu0
  %v273 = vpop.f32.mrb[0].mxu0
  %v274 = vadd.f32 %v55, %v273
  %v275 = vpop.f32.mrb[0].mxu0
  %276 = vmatprep.mubr.bf16.mxu0 0
  %277 = vmatmul.mubr.bf16.gmra.mrb[0].mxu0 %v161
  %v278 = vpop.f32.mrb[0].mxu0
  %v279 = vadd.f32 %v55, %v278
  %v280 = vpop.f32.mrb[0].mxu0
  %v281 = vpop.f32.mrb[0].mxu0
  %v282 = vadd.f32 %v55, %v281
  %v283 = vpop.f32.mrb[0].mxu0
  %284 = vmatprep.mubr.bf16.mxu0 0
  %285 = vmatmul.mubr.bf16.gmra.mrb[0].mxu0 %v164
  %v286 = vpop.f32.mrb[0].mxu0
  %v287 = vadd.f32 %v55, %v286
  %v288 = vpop.f32.mrb[0].mxu0
  %v289 = vpop.f32.mrb[0].mxu0
  %v290 = vadd.f32 %v55, %v289
  %v291 = vpop.f32.mrb[0].mxu0
  %292 = vmatprep.mubr.bf16.mxu0 0
  %293 = vmatmul.mubr.bf16.gmra.mrb[0].mxu0 %v167
  %v294 = vpop.f32.mrb[0].mxu0
  %v295 = vadd.f32 %v55, %v294
  %v296 = vpop.f32.mrb[0].mxu0
  %v297 = vpop.f32.mrb[0].mxu0
  %v298 = vadd.f32 %v55, %v297
  %v299 = vpop.f32.mrb[0].mxu0
  %300 = vmatprep.mubr.bf16.mxu0 0
  %301 = vmatmul.mubr.bf16.gmra.mrb[0].mxu0 %v170
  %v302 = vpop.f32.mrb[0].mxu0
  %v303 = vadd.f32 %v55, %v302
  %v304 = vpop.f32.mrb[0].mxu0
  %v305 = vpop.f32.mrb[0].mxu0
  %v306 = vpop.f32.mrb[0].mxu0
  %307 = vdwg.mxu0
  %vm308 = vcmp.gt.f32.partialorder %v207, 0.0
  %vm309 = vcmp.gt.f32.partialorder %v210, 0.0
  %vm310 = vcmp.gt.f32.partialorder %v215, 0.0
  %vm311 = vcmp.gt.f32.partialorder %v218, 0.0
  %vm312 = vcmp.gt.f32.partialorder %v223, 0.0
  %vm313 = vcmp.gt.f32.partialorder %v226, 0.0
  %vm314 = vcmp.gt.f32.partialorder %v231, 0.0
  %vm315 = vcmp.gt.f32.partialorder %v234, 0.0
  %vm316 = vcmp.gt.f32.partialorder %v239, 0.0
  %vm317 = vcmp.gt.f32.partialorder %v242, 0.0
  %vm318 = vcmp.gt.f32.partialorder %v247, 0.0
  %vm319 = vcmp.gt.f32.partialorder %v250, 0.0
  %vm320 = vcmp.gt.f32.partialorder %v255, 0.0
  %vm321 = vcmp.gt.f32.partialorder %v258, 0.0
  %vm322 = vcmp.gt.f32.partialorder %v263, 0.0
  %vm323 = vcmp.gt.f32.partialorder %v266, 0.0
  %vm324 = vcmp.gt.f32.partialorder %v271, 0.0
  %vm325 = vcmp.gt.f32.partialorder %v274, 0.0
  %vm326 = vcmp.gt.f32.partialorder %v279, 0.0
  %vm327 = vcmp.gt.f32.partialorder %v282, 0.0
  %vm328 = vcmp.gt.f32.partialorder %v287, 0.0
  %vm329 = vcmp.gt.f32.partialorder %v290, 0.0
  %vm330 = vcmp.gt.f32.partialorder %v295, 0.0
  %vm331 = vcmp.gt.f32.partialorder %v298, 0.0
  %vm332 = vcmp.gt.f32.partialorder %v303, 0.0
  %v333 = vmul.f32 %v207, 0.01
  %v334 = vmul.f32 %v210, 0.01
  %v335 = vmul.f32 %v215, 0.01
  %v336 = vmul.f32 %v218, 0.01
  %v337 = vmul.f32 %v223, 0.01
  %v338 = vmul.f32 %v226, 0.01
  %v339 = vmul.f32 %v231, 0.01
  %v340 = vmul.f32 %v234, 0.01
  %v341 = vmul.f32 %v239, 0.01
  %v342 = vmul.f32 %v242, 0.01
  %v343 = vmul.f32 %v247, 0.01
  %v344 = vmul.f32 %v250, 0.01
  %v345 = vmul.f32 %v255, 0.01
  %v346 = vmul.f32 %v258, 0.01
  %v347 = vmul.f32 %v263, 0.01
  %v348 = vmul.f32 %v266, 0.01
  %v349 = vmul.f32 %v271, 0.01
  %v350 = vmul.f32 %v274, 0.01
  %v351 = vmul.f32 %v279, 0.01
  %v352 = vmul.f32 %v282, 0.01
  %v353 = vmul.f32 %v287, 0.01
  %v354 = vmul.f32 %v290, 0.01
  %v355 = vmul.f32 %v295, 0.01
  %v356 = vmul.f32 %v298, 0.01
  %v357 = vmul.f32 %v303, 0.01
  %v358 = vsel %vm308, %v207, %v333
  %v359 = vsel %vm309, %v210, %v334
  %v360 = vsel %vm310, %v215, %v335
  %v361 = vsel %vm311, %v218, %v336
  %v362 = vsel %vm312, %v223, %v337
  %v363 = vsel %vm313, %v226, %v338
  %v364 = vsel %vm314, %v231, %v339
  %v365 = vsel %vm315, %v234, %v340
  %v366 = vsel %vm316, %v239, %v341
  %v367 = vsel %vm317, %v242, %v342
  %v368 = vsel %vm318, %v247, %v343
  %v369 = vsel %vm319, %v250, %v344
  %v370 = vsel %vm320, %v255, %v345
  %v371 = vsel %vm321, %v258, %v346
  %v372 = vsel %vm322, %v263, %v347
  %v373 = vsel %vm323, %v266, %v348
  %v374 = vsel %vm324, %v271, %v349
  %v375 = vsel %vm325, %v274, %v350
  %v376 = vsel %vm326, %v279, %v351
  %v377 = vsel %vm327, %v282, %v352
  %v378 = vsel %vm328, %v287, %v353
  %v379 = vsel %vm329, %v290, %v354
  %v380 = vsel %vm330, %v295, %v355
  %v381 = vsel %vm331, %v298, %v356
  %v382 = vsel %vm332, %v303, %v357
  %v383 = vpack.c.bf16 %v359, %v358
  %v384 = vpack.c.bf16 %v361, %v360
  %v385 = vpack.c.bf16 %v363, %v362
  %v386 = vpack.c.bf16 %v365, %v364
  %v387 = vpack.c.bf16 %v367, %v366
  %v388 = vpack.c.bf16 %v369, %v368
  %v389 = vpack.c.bf16 %v371, %v370
  %v390 = vpack.c.bf16 %v373, %v372
  %v391 = vpack.c.bf16 %v375, %v374
  %v392 = vpack.c.bf16 %v377, %v376
  %v393 = vpack.c.bf16 %v379, %v378
  %v394 = vpack.c.bf16 %v381, %v380
  %v395 = vpack.c.bf16 %v382, %v382
  %v396 = vld [vmem:[%s3] sm:$0xf]
  %v397 = vld [vmem:[%s3 + $0x4] sm:$0xf]
  %v398 = vld [vmem:[%s3 + $0x8] sm:$0xf]
  %v399 = vld [vmem:[%s3 + $0xc] sm:$0xf]
  %v400 = vld [vmem:[%s3 + $0x10] sm:$0xf]
  %v401 = vld [vmem:[%s3 + $0x14] sm:$0xf]
  %v402 = vld [vmem:[%s3 + $0x18] sm:$0xf]
  %v403 = vld [vmem:[%s3 + $0x1c] sm:$0xf]
  %v404 = vld [vmem:[%s3 + $0x20] sm:$0xf]
  %v405 = vld [vmem:[%s3 + $0x24] sm:$0xf]
  %v406 = vld [vmem:[%s3 + $0x28] sm:$0xf]
  %v407 = vld [vmem:[%s3 + $0x2c] sm:$0xf]
  %v408 = vld [vmem:[%s3 + $0x30] sm:$0xf]
  %v409 = vld [vmem:[%s3 + $0x34] sm:$0xf]
  %v410 = vld [vmem:[%s3 + $0x38] sm:$0xf]
  %v411 = vld [vmem:[%s3 + $0x3c] sm:$0xf]
  %v412 = vld [vmem:[%s4] sm:$0x1]
  %v414 = vlaneseq
  %v415 = vshrl.u32 %v414, 7
  %v416 = vsub.s32 0, %v415
  %v417 = vrot.slane %v412, %v416
  %v435 = vunpack.c.l.b16 %v396
  %v436 = vunpack.c.l.b16 %v397
  %v437 = vunpack.c.l.b16 %v398
  %v438 = vunpack.c.l.b16 %v399
  %v439 = vunpack.c.l.b16 %v400
  %v440 = vunpack.c.l.b16 %v401
  %v441 = vunpack.c.l.b16 %v402
  %v442 = vunpack.c.l.b16 %v403
  %v443 = vunpack.c.l.b16 %v404
  %v444 = vunpack.c.l.b16 %v405
  %v445 = vunpack.c.l.b16 %v406
  %v446 = vunpack.c.l.b16 %v407
  %v447 = vunpack.c.l.b16 %v408
  %v448 = vunpack.c.l.b16 %v409
  %v449 = vunpack.c.l.b16 %v410
  %v450 = vunpack.c.l.b16 %v411
  %v451 = vpack.c.b16 %v436, %v435
  %v452 = vpack.c.b16 %v438, %v437
  %v453 = vpack.c.b16 %v440, %v439
  %v454 = vpack.c.b16 %v442, %v441
  %v455 = vpack.c.b16 %v444, %v443
  %v456 = vpack.c.b16 %v446, %v445
  %v457 = vpack.c.b16 %v448, %v447
  %v458 = vpack.c.b16 %v450, %v449
  %467 = vmatprep.subr.bf16.mxu0 0
  %468 = vmatpush1.bf16.msra.mxu0 %v451
  %469 = vmatprep.subr.bf16.mxu0 0
  %470 = vmatpush1.bf16.msra.mxu0 %v452
  %471 = vmatprep.subr.bf16.mxu0 0
  %472 = vmatpush1.bf16.msra.mxu0 %v453
  %473 = vmatprep.subr.bf16.mxu0 0
  %474 = vmatpush1.bf16.msra.mxu0 %v454
  %475 = vmatprep.subr.bf16.mxu0 0
  %476 = vmatpush1.bf16.msra.mxu0 %v455
  %477 = vmatprep.subr.bf16.mxu0 0
  %478 = vmatpush1.bf16.msra.mxu0 %v456
  %479 = vmatprep.subr.bf16.mxu0 0
  %480 = vmatpush1.bf16.msra.mxu0 %v457
  %481 = vmatprep.subr.bf16.mxu0 0
  %482 = vmatpush1.bf16.msra.mxu0 %v458
  %483 = vmatprep.subr.bf16.mxu0 0
  %484 = vmatpush1.bf16.msra.mxu0 0
  %485 = vmatprep.subr.bf16.mxu0 0
  %486 = vmatpush1.bf16.msra.mxu0 0
  %487 = vmatprep.subr.bf16.mxu0 0
  %488 = vmatpush1.bf16.msra.mxu0 0
  %489 = vmatprep.subr.bf16.mxu0 0
  %490 = vmatpush1.bf16.msra.mxu0 0
  %491 = vmatprep.subr.bf16.mxu0 0
  %492 = vmatpush1.bf16.msra.mxu0 0
  %493 = vmatprep.subr.bf16.mxu0 0
  %494 = vmatpush1.bf16.msra.mxu0 0
  %495 = vmatprep.subr.bf16.mxu0 0
  %496 = vmatpush1.bf16.msra.mxu0 0
  %497 = vmatprep.subr.bf16.mxu0 0
  %498 = vmatpush1.bf16.msra.mxu0 0
  %499 = vmatprep.mubr.bf16.mxu0 0
  %500 = vmatmul.mubr.bf16.gmra.mrb[0].mxu0 %v383
  %v501 = vpop.f32.mrb[0].mxu0
  %v502 = vadd.f32 %v417, %v501
  %v503 = vpop.f32.mrb[0].mxu0
  %v504 = vpop.f32.mrb[0].mxu0
  %v505 = vadd.f32 %v417, %v504
  %v506 = vpop.f32.mrb[0].mxu0
  %507 = vmatprep.mubr.bf16.mxu0 0
  %508 = vmatmul.mubr.bf16.gmra.mrb[0].mxu0 %v384
  %v509 = vpop.f32.mrb[0].mxu0
  %v510 = vadd.f32 %v417, %v509
  %v511 = vpop.f32.mrb[0].mxu0
  %v512 = vpop.f32.mrb[0].mxu0
  %v513 = vadd.f32 %v417, %v512
  %v514 = vpop.f32.mrb[0].mxu0
  %515 = vmatprep.mubr.bf16.mxu0 0
  %516 = vmatmul.mubr.bf16.gmra.mrb[0].mxu0 %v385
  %v517 = vpop.f32.mrb[0].mxu0
  %v518 = vadd.f32 %v417, %v517
  %v519 = vpop.f32.mrb[0].mxu0
  %v520 = vpop.f32.mrb[0].mxu0
  %v521 = vadd.f32 %v417, %v520
  %v522 = vpop.f32.mrb[0].mxu0
  %523 = vmatprep.mubr.bf16.mxu0 0
  %524 = vmatmul.mubr.bf16.gmra.mrb[0].mxu0 %v386
  %v525 = vpop.f32.mrb[0].mxu0
  %v526 = vadd.f32 %v417, %v525
  %v527 = vpop.f32.mrb[0].mxu0
  %v528 = vpop.f32.mrb[0].mxu0
  %v529 = vadd.f32 %v417, %v528
  %v530 = vpop.f32.mrb[0].mxu0
  %531 = vmatprep.mubr.bf16.mxu0 0
  %532 = vmatmul.mubr.bf16.gmra.mrb[0].mxu0 %v387
  %v533 = vpop.f32.mrb[0].mxu0
  %v534 = vadd.f32 %v417, %v533
  %v535 = vpop.f32.mrb[0].mxu0
  %v536 = vpop.f32.mrb[0].mxu0
  %v537 = vadd.f32 %v417, %v536
  %v538 = vpop.f32.mrb[0].mxu0
  %539 = vmatprep.mubr.bf16.mxu0 0
  %540 = vmatmul.mubr.bf16.gmra.mrb[0].mxu0 %v388
  %v541 = vpop.f32.mrb[0].mxu0
  %v542 = vadd.f32 %v417, %v541
  %v543 = vpop.f32.mrb[0].mxu0
  %v544 = vpop.f32.mrb[0].mxu0
  %v545 = vadd.f32 %v417, %v544
  %v546 = vpop.f32.mrb[0].mxu0
  %547 = vmatprep.mubr.bf16.mxu0 0
  %548 = vmatmul.mubr.bf16.gmra.mrb[0].mxu0 %v389
  %v549 = vpop.f32.mrb[0].mxu0
  %v550 = vadd.f32 %v417, %v549
  %v551 = vpop.f32.mrb[0].mxu0
  %v552 = vpop.f32.mrb[0].mxu0
  %v553 = vadd.f32 %v417, %v552
  %v554 = vpop.f32.mrb[0].mxu0
  %555 = vmatprep.mubr.bf16.mxu0 0
  %556 = vmatmul.mubr.bf16.gmra.mrb[0].mxu0 %v390
  %v557 = vpop.f32.mrb[0].mxu0
  %v558 = vadd.f32 %v417, %v557
  %v559 = vpop.f32.mrb[0].mxu0
  %v560 = vpop.f32.mrb[0].mxu0
  %v561 = vadd.f32 %v417, %v560
  %v562 = vpop.f32.mrb[0].mxu0
  %563 = vmatprep.mubr.bf16.mxu0 0
  %564 = vmatmul.mubr.bf16.gmra.mrb[0].mxu0 %v391
  %v565 = vpop.f32.mrb[0].mxu0
  %v566 = vadd.f32 %v417, %v565
  %v567 = vpop.f32.mrb[0].mxu0
  %v568 = vpop.f32.mrb[0].mxu0
  %v569 = vadd.f32 %v417, %v568
  %v570 = vpop.f32.mrb[0].mxu0
  %571 = vmatprep.mubr.bf16.mxu0 0
  %572 = vmatmul.mubr.bf16.gmra.mrb[0].mxu0 %v392
  %v573 = vpop.f32.mrb[0].mxu0
  %v574 = vadd.f32 %v417, %v573
  %v575 = vpop.f32.mrb[0].mxu0
  %v576 = vpop.f32.mrb[0].mxu0
  %v577 = vadd.f32 %v417, %v576
  %v578 = vpop.f32.mrb[0].mxu0
  %579 = vmatprep.mubr.bf16.mxu0 0
  %580 = vmatmul.mubr.bf16.gmra.mrb[0].mxu0 %v393
  %v581 = vpop.f32.mrb[0].mxu0
  %v582 = vadd.f32 %v417, %v581
  %v583 = vpop.f32.mrb[0].mxu0
  %v584 = vpop.f32.mrb[0].mxu0
  %v585 = vadd.f32 %v417, %v584
  %v586 = vpop.f32.mrb[0].mxu0
  %587 = vmatprep.mubr.bf16.mxu0 0
  %588 = vmatmul.mubr.bf16.gmra.mrb[0].mxu0 %v394
  %v589 = vpop.f32.mrb[0].mxu0
  %v590 = vadd.f32 %v417, %v589
  %v591 = vpop.f32.mrb[0].mxu0
  %v592 = vpop.f32.mrb[0].mxu0
  %v593 = vadd.f32 %v417, %v592
  %v594 = vpop.f32.mrb[0].mxu0
  %595 = vmatprep.mubr.bf16.mxu0 0
  %596 = vmatmul.mubr.bf16.gmra.mrb[0].mxu0 %v395
  %v597 = vpop.f32.mrb[0].mxu0
  %v598 = vadd.f32 %v417, %v597
  %v599 = vpop.f32.mrb[0].mxu0
  %v600 = vpop.f32.mrb[0].mxu0
  %v601 = vpop.f32.mrb[0].mxu0
  %602 = vdwg.mxu0
  %vm603 = vcmask 130048
  %604 = vst.msk [vmem:[%s5] sm:$0xff] %vm603, %v502
  %605 = vst.msk [vmem:[%s5 + $0x8] sm:$0xff] %vm603, %v505
  %606 = vst.msk [vmem:[%s5 + $0x10] sm:$0xff] %vm603, %v510
  %607 = vst.msk [vmem:[%s5 + $0x18] sm:$0xff] %vm603, %v513
  %608 = vst.msk [vmem:[%s5 + $0x20] sm:$0xff] %vm603, %v518
  %609 = vst.msk [vmem:[%s5 + $0x28] sm:$0xff] %vm603, %v521
  %610 = vst.msk [vmem:[%s5 + $0x30] sm:$0xff] %vm603, %v526
  %611 = vst.msk [vmem:[%s5 + $0x38] sm:$0xff] %vm603, %v529
  %612 = vst.msk [vmem:[%s5 + $0x40] sm:$0xff] %vm603, %v534
  %613 = vst.msk [vmem:[%s5 + $0x48] sm:$0xff] %vm603, %v537
  %614 = vst.msk [vmem:[%s5 + $0x50] sm:$0xff] %vm603, %v542
  %615 = vst.msk [vmem:[%s5 + $0x58] sm:$0xff] %vm603, %v545
  %616 = vst.msk [vmem:[%s5 + $0x60] sm:$0xff] %vm603, %v550
  %617 = vst.msk [vmem:[%s5 + $0x68] sm:$0xff] %vm603, %v553
  %618 = vst.msk [vmem:[%s5 + $0x70] sm:$0xff] %vm603, %v558
  %619 = vst.msk [vmem:[%s5 + $0x78] sm:$0xff] %vm603, %v561
  %620 = vst.msk [vmem:[%s5 + $0x80] sm:$0xff] %vm603, %v566
  %621 = vst.msk [vmem:[%s5 + $0x88] sm:$0xff] %vm603, %v569
  %622 = vst.msk [vmem:[%s5 + $0x90] sm:$0xff] %vm603, %v574
  %623 = vst.msk [vmem:[%s5 + $0x98] sm:$0xff] %vm603, %v577
  %624 = vst.msk [vmem:[%s5 + $0xa0] sm:$0xff] %vm603, %v582
  %625 = vst.msk [vmem:[%s5 + $0xa8] sm:$0xff] %vm603, %v585
  %626 = vst.msk [vmem:[%s5 + $0xb0] sm:$0xff] %vm603, %v590
  %627 = vst.msk [vmem:[%s5 + $0xb8] sm:$0xff] %vm603, %v593
  %628 = vst.msk [vmem:[%s5 + $0xc0] sm:$0xff] %vm603, %v598
  // Predicated region
  $region22: #{tpu_custom_call.1} parent=0 // pred_check
    _
  $region23: #{tpu_custom_call.1} parent=0 // pred_check_branch
    %630 = sbr.rel (0) target = $region25
  $region24: #{tpu_custom_call.1} parent=0 // pred_region
    _
  $region25: #{tpu_custom_call.1} parent=0 // pred_fallthru
    _
  // Predicated region
  $region26: #{tpu_custom_call.1} parent=0 // pred_check
    _
  $region27: #{tpu_custom_call.1} parent=0 // pred_check_branch
    %632 = sbr.rel (0) target = $region29
  $region28: #{tpu_custom_call.1} parent=0 // pred_region
    _
  $region29: #{tpu_custom_call.1} parent=0 // pred_fallthru
    _

</llo_original>
